<compile_context>
chip_gen: v6e
topology: v6e:2x2x1
jax: 0.10.0
libtpu: 0.0.40
codegen_flags: <defaults>
</compile_context>

<pallas_src>
import jax
import jax.numpy as jnp
from jax.experimental import pallas as pl
from jax.experimental.pallas import tpu as pltpu


def mlp_kernel(x_ref, w1_ref, b1_ref, w2_ref, b2_ref, o_ref, acc_ref):
    h_idx = pl.program_id(1)

    @pl.when(h_idx == 0)
    def _init():
        acc_ref[...] = jnp.zeros_like(acc_ref)

    # fc_1 on this hidden tile: x_tile @ W1[:, h_tile] + b1[h_tile]
    h = jnp.dot(x_ref[...], w1_ref[...], preferred_element_type=jnp.float32)
    # dropout (eval mode) == identity; relu in f32 on the VPU.
    h = jnp.maximum(h + b1_ref[...], 0.0)

    # fc_2 partial: accumulate h_tile @ W2[h_tile, :] into the f32 scratch.
    acc_ref[...] += jnp.dot(h.astype(w2_ref.dtype), w2_ref[...],
                            preferred_element_type=jnp.float32)

    @pl.when(h_idx == pl.num_programs(1) - 1)
    def _finalize():
        o_ref[...] = (acc_ref[...] + b2_ref[...]).astype(o_ref.dtype)


def _round_up(x, m):
    return ((x + m - 1) // m) * m


def mlp_forward(x, w1, b1, w2, b2, *, tm=None, th=None):
    """Fused MLP forward. x:[M,K], w1:[K,H], b1:[1,H], w2:[H,N], b2:[1,N]."""
    M, K = x.shape
    Kw, H = w1.shape
    Hw, N = w2.shape
    assert K == Kw and H == Hw

    # Tile sizes: batch tile multiple of 8, hidden tile multiple of 128.
    # (Sized so double-buffered tiles + f32 accumulator stay well inside the
    # 64 MiB v7x VMEM budget; v5e/v6e have headroom to spare.)
    if tm is None:
        tm = min(256, _round_up(M, 8))
    if th is None:
        th = min(512, _round_up(H, 128))

    # Lane-dense / tile-aligned padding (exact: zero padding contributes 0).
    M_pad = _round_up(M, tm)
    K_pad = _round_up(K, 128)
    H_pad = _round_up(H, th)
    N_pad = _round_up(N, 128)

    xp = jnp.pad(x, ((0, M_pad - M), (0, K_pad - K)))
    w1p = jnp.pad(w1, ((0, K_pad - K), (0, H_pad - H)))
    b1p = jnp.pad(b1.reshape(1, H), ((0, 0), (0, H_pad - H)))
    w2p = jnp.pad(w2, ((0, H_pad - H), (0, N_pad - N)))
    b2p = jnp.pad(b2.reshape(1, N), ((0, 0), (0, N_pad - N)))

    grid = (M_pad // tm, H_pad // th)

    out_padded = pl.pallas_call(
        mlp_kernel,
        out_shape=jax.ShapeDtypeStruct((M_pad, N_pad), x.dtype),
        grid_spec=pltpu.PrefetchScalarGridSpec(
            num_scalar_prefetch=0,
            grid=grid,
            in_specs=[
                pl.BlockSpec((tm, K_pad), lambda i, h: (i, 0)),   # x tile
                pl.BlockSpec((K_pad, th), lambda i, h: (0, h)),   # W1 tile
                pl.BlockSpec((1, th),     lambda i, h: (0, h)),   # b1 tile
                pl.BlockSpec((th, N_pad), lambda i, h: (h, 0)),   # W2 tile
                pl.BlockSpec((1, N_pad),  lambda i, h: (0, 0)),   # b2
            ],
            out_specs=pl.BlockSpec((tm, N_pad), lambda i, h: (i, 0)),
            scratch_shapes=[pltpu.VMEM((tm, N_pad), jnp.float32)],
        ),
        compiler_params=pltpu.CompilerParams(
            dimension_semantics=("parallel", "arbitrary"),
            vmem_limit_bytes=64 * 1024 * 1024,
        ),
    )(xp, w1p, b1p, w2p, b2p)

    return out_padded[:M, :N]


def init_params(key, input_dim, hidden_dim, output_dim, dtype=jnp.float32):
    # Mimics PyTorch nn.Linear default init U[-1/sqrt(fan_in), 1/sqrt(fan_in)].
    k1, k2, k3, k4 = jax.random.split(key, 4)
    bound1 = 1.0 / jnp.sqrt(input_dim)
    bound2 = 1.0 / jnp.sqrt(hidden_dim)
    w1 = jax.random.uniform(k1, (input_dim, hidden_dim), dtype, -bound1, bound1)
    b1 = jax.random.uniform(k2, (1, hidden_dim), dtype, -bound1, bound1)
    w2 = jax.random.uniform(k3, (hidden_dim, output_dim), dtype, -bound2, bound2)
    b2 = jax.random.uniform(k4, (1, output_dim), dtype, -bound2, bound2)
    return w1, b1, w2, b2


def _reference(x, w1, b1, w2, b2):
    # Pure-JAX reference (dropout in eval mode == identity).
    return jnp.maximum(x @ w1 + b1, 0.0) @ w2 + b2


if __name__ == "__main__":
    key = jax.random.PRNGKey(0)

    # --- Test 1: tiny shapes matching the module's typical A2C usage. ---
    batch, input_dim, hidden_dim, output_dim = 8, 16, 32, 4
    kx, kp, key = jax.random.split(key, 3)
    x = jax.random.normal(kx, (batch, input_dim), jnp.float32)
    w1, b1, w2, b2 = init_params(kp, input_dim, hidden_dim, output_dim)

    out = mlp_forward(x, w1, b1, w2, b2)
    jax.block_until_ready(out)
    ref = _reference(x, w1, b1, w2, b2)
    assert out.shape == (batch, output_dim)
    assert jnp.allclose(out, ref, atol=1e-4, rtol=1e-5), "tiny-shape mismatch"

    # --- Test 2: tile-aligned shapes that exercise the 2-D grid
    #     (2 batch tiles x 2 hidden-reduction tiles) and the accumulator. ---
    batch2, in2, hid2, out2 = 512, 128, 1024, 128
    kx2, kp2 = jax.random.split(key)
    x2 = jax.random.normal(kx2, (batch2, in2), jnp.float32)
    w1b, b1b, w2b, b2b = init_params(kp2, in2, hid2, out2)

    out_big = mlp_forward(x2, w1b, b1b, w2b, b2b)
    jax.block_until_ready(out_big)
    ref_big = _reference(x2, w1b, b1b, w2b, b2b)
    assert out_big.shape == (batch2, out2)
    assert jnp.allclose(out_big, ref_big, atol=1e-3, rtol=1e-4), \
        "tiled-shape mismatch"

    print("KERNEL_OK")
</pallas_src>

<mosaic_0001>
module attributes {stable_mosaic.version = 11 : i64} {
  func.func @mlp_kernel(%arg0: i32, %arg1: i32, %arg2: memref<8x128xf32, #tpu.memory_space<vmem>>, %arg3: memref<128x128xf32, #tpu.memory_space<vmem>>, %arg4: memref<1x128xf32, #tpu.memory_space<vmem>>, %arg5: memref<128x128xf32, #tpu.memory_space<vmem>>, %arg6: memref<1x128xf32, #tpu.memory_space<vmem>>, %arg7: memref<8x128xf32, #tpu.memory_space<vmem>>, %arg8: memref<8x128xf32, #tpu.memory_space<vmem>>) attributes {dimension_semantics = [#tpu.dimension_semantics<parallel>, #tpu.dimension_semantics<arbitrary>], iteration_bounds = array<i64: 1, 1>, scalar_prefetch = 0 : i64, scratch_operands = 1 : i64, tpu.core_type = #tpu.core_type<tc>, window_params = [{transform_indices = @transform_0, window_bounds = array<i64: 8, 128>}, {transform_indices = @transform_1, window_bounds = array<i64: 128, 128>}, {transform_indices = @transform_2, window_bounds = array<i64: 1, 128>}, {transform_indices = @transform_3, window_bounds = array<i64: 128, 128>}, {pipeline_mode = #tpu.pipeline_mode<synchronous>, transform_indices = @transform_4, window_bounds = array<i64: 1, 128>}, {transform_indices = @transform_5, window_bounds = array<i64: 8, 128>}]} {
    %c0_i32 = arith.constant 0 : i32
    %0 = arith.cmpi eq, %arg1, %c0_i32 : i32
    %1 = arith.extui %0 : i1 to i32
    %c0_i32_0 = arith.constant 0 : i32
    %2 = arith.cmpi ne, %1, %c0_i32_0 : i32
    scf.if %2 {
      %cst_16 = arith.constant 0.000000e+00 : f32
      %19 = vector.broadcast %cst_16 : f32 to vector<8x128xf32>
      %c0_17 = arith.constant 0 : index
      %c0_18 = arith.constant 0 : index
      %20 = vector.load %arg8[%c0_17, %c0_18] : memref<8x128xf32, #tpu.memory_space<vmem>>, vector<8x128xf32>
      tpu.vector_store %arg8[%c0_17, %c0_18], %19 {strides = array<i32>} : memref<8x128xf32, #tpu.memory_space<vmem>>, vector<8x128xf32>,
    } else {
    }
    %c0 = arith.constant 0 : index
    %c0_1 = arith.constant 0 : index
    %3 = vector.load %arg2[%c0, %c0_1] : memref<8x128xf32, #tpu.memory_space<vmem>>, vector<8x128xf32>
    %c0_2 = arith.constant 0 : index
    %c0_3 = arith.constant 0 : index
    %4 = vector.load %arg3[%c0_2, %c0_3] : memref<128x128xf32, #tpu.memory_space<vmem>>, vector<128x128xf32>
    %cst = arith.constant dense<0.000000e+00> : vector<8x128xf32>
    %5 = tpu.matmul %3, %4, %cst {dimension_numbers = #tpu.dot_dimension_numbers<[1], [0], [0], [1], [0, 0, 1, 1], [], []>} : vector<8x128xf32>, vector<128x128xf32>, vector<8x128xf32> -> vector<8x128xf32>
    %c0_4 = arith.constant 0 : index
    %c0_5 = arith.constant 0 : index
    %6 = vector.load %arg4[%c0_4, %c0_5] : memref<1x128xf32, #tpu.memory_space<vmem>>, vector<1x128xf32>
    %7 = vector.broadcast %6 : vector<1x128xf32> to vector<8x128xf32>
    %8 = arith.addf %5, %7 : vector<8x128xf32>
    %cst_6 = arith.constant 0.000000e+00 : f32
    %9 = vector.broadcast %cst_6 : f32 to vector<8x128xf32>
    %10 = arith.maximumf %8, %9 : vector<8x128xf32>
    %c0_7 = arith.constant 0 : index
    %c0_8 = arith.constant 0 : index
    %11 = vector.load %arg8[%c0_7, %c0_8] : memref<8x128xf32, #tpu.memory_space<vmem>>, vector<8x128xf32>
    %c0_9 = arith.constant 0 : index
    %c0_10 = arith.constant 0 : index
    %12 = vector.load %arg5[%c0_9, %c0_10] : memref<128x128xf32, #tpu.memory_space<vmem>>, vector<128x128xf32>
    %cst_11 = arith.constant dense<0.000000e+00> : vector<8x128xf32>
    %13 = tpu.matmul %10, %12, %cst_11 {dimension_numbers = #tpu.dot_dimension_numbers<[1], [0], [0], [1], [0, 0, 1, 1], [], []>} : vector<8x128xf32>, vector<128x128xf32>, vector<8x128xf32> -> vector<8x128xf32>
    %14 = arith.addf %11, %13 : vector<8x128xf32>
    %c0_12 = arith.constant 0 : index
    %c0_13 = arith.constant 0 : index
    %15 = vector.load %arg8[%c0_12, %c0_13] : memref<8x128xf32, #tpu.memory_space<vmem>>, vector<8x128xf32>
    tpu.vector_store %arg8[%c0_12, %c0_13], %14 {strides = array<i32>} : memref<8x128xf32, #tpu.memory_space<vmem>>, vector<8x128xf32>,
    %c0_i32_14 = arith.constant 0 : i32
    %16 = arith.cmpi eq, %arg1, %c0_i32_14 : i32
    %17 = arith.extui %16 : i1 to i32
    %c0_i32_15 = arith.constant 0 : i32
    %18 = arith.cmpi ne, %17, %c0_i32_15 : i32
    scf.if %18 {
      %c0_16 = arith.constant 0 : index
      %c0_17 = arith.constant 0 : index
      %19 = vector.load %arg8[%c0_16, %c0_17] : memref<8x128xf32, #tpu.memory_space<vmem>>, vector<8x128xf32>
      %c0_18 = arith.constant 0 : index
      %c0_19 = arith.constant 0 : index
      %20 = vector.load %arg6[%c0_18, %c0_19] : memref<1x128xf32, #tpu.memory_space<vmem>>, vector<1x128xf32>
      %21 = vector.broadcast %20 : vector<1x128xf32> to vector<8x128xf32>
      %22 = arith.addf %19, %21 : vector<8x128xf32>
      %c0_20 = arith.constant 0 : index
      %c0_21 = arith.constant 0 : index
      %23 = vector.load %arg7[%c0_20, %c0_21] : memref<8x128xf32, #tpu.memory_space<vmem>>, vector<8x128xf32>
      tpu.vector_store %arg7[%c0_20, %c0_21], %22 {strides = array<i32>} : memref<8x128xf32, #tpu.memory_space<vmem>>, vector<8x128xf32>,
    } else {
    }
    return
  }
  func.func @transform_0(%arg0: i32, %arg1: i32) -> (i32, i32) {
    %c0_i32 = arith.constant 0 : i32
    %c0_i32_0 = arith.constant 0 : i32
    return %arg0, %c0_i32 : i32, i32
  }
  func.func @transform_1(%arg0: i32, %arg1: i32) -> (i32, i32) {
    %c0_i32 = arith.constant 0 : i32
    %c0_i32_0 = arith.constant 0 : i32
    return %c0_i32, %arg1 : i32, i32
  }
  func.func @transform_2(%arg0: i32, %arg1: i32) -> (i32, i32) {
    %c0_i32 = arith.constant 0 : i32
    %c0_i32_0 = arith.constant 0 : i32
    return %c0_i32, %arg1 : i32, i32
  }
  func.func @transform_3(%arg0: i32, %arg1: i32) -> (i32, i32) {
    %c0_i32 = arith.constant 0 : i32
    %c0_i32_0 = arith.constant 0 : i32
    return %arg1, %c0_i32 : i32, i32
  }
  func.func @transform_4(%arg0: i32, %arg1: i32) -> (i32, i32) {
    %c0_i32 = arith.constant 0 : i32
    %c0_i32_0 = arith.constant 0 : i32
    %c0_i32_1 = arith.constant 0 : i32
    return %c0_i32, %c0_i32_0 : i32, i32
  }
  func.func @transform_5(%arg0: i32, %arg1: i32) -> (i32, i32) {
    %c0_i32 = arith.constant 0 : i32
    %c0_i32_0 = arith.constant 0 : i32
    return %arg0, %c0_i32 : i32, i32
  }
}

</mosaic_0001>

<llo_original>
// kernel: tpu_custom_call.1
$region0: #{tpu_custom_call.1}
  #allocation0 [shape = 'u32[]', space=smem, size = 0x4, offset = 0x4, fixed_abs, tag = 'smem constant byte address 0x4 - core index']
  #allocation1 [shape = 'u32[144,128]{1,0:T(1,128)}', space=vmem, size = 0x12000, scoped, tag = 'internal scratch']
  #allocation2 [shape = 'f32[8,128]{1,0:T(8,128)}', space=vmem, size = 0x1000, scoped, tag = 'scratch operand']
  %s0 = inlined_call_operand.hbm [shape: f32[8,128], index: 0, kind: input, shape index: {}]
  %s1 = inlined_call_operand.hbm [shape: f32[128,128], index: 1, kind: input, shape index: {}]
  %s2 = inlined_call_operand.vmem [shape: f32[1,128], index: 2, kind: input, shape index: {}]
  %s3 = inlined_call_operand.hbm [shape: f32[128,128], index: 3, kind: input, shape index: {}]
  %s4 = inlined_call_operand.vmem [shape: f32[1,128], index: 4, kind: input, shape index: {}]
  %s5 = inlined_call_operand.hbm [shape: f32[8,128], index: 5, kind: output, shape index: {}]
  %s6 = sld [smem:[#allocation0]]
  $region50: #{tpu_custom_call.1} parent=0
    _
  %s8 = ssub.s32 1, %s6
  %s9 = scalar_select 0, %s8, %s6
  $region1: #{tpu_custom_call.1} parent=0
    #allocation3 [shape = 'u8[4096]{0}', space=vmem, size = 0x1000, scoped, tag = 'input window, operand 0, single buffered']
    #allocation4 [shape = 's32[1]{0}', space=sflag, size = 0x4, scoped, tag = 'scoped memory for tpu_custom_call.1']
    #allocation5 [shape = 's32[1]{0}', space=sflag, size = 0x4, scoped, tag = 'scoped memory for tpu_custom_call.1']
    #allocation6 [shape = 'u8[65536]{0}', space=vmem, size = 0x10000, scoped, tag = 'input window, operand 1, single buffered']
    #allocation7 [shape = 's32[1]{0}', space=sflag, size = 0x4, scoped, tag = 'scoped memory for tpu_custom_call.1']
    #allocation8 [shape = 'u8[65536]{0}', space=vmem, size = 0x10000, scoped, tag = 'input window, operand 3, single buffered']
    #allocation9 [shape = 'u8[4096]{0}', space=vmem, size = 0x1000, scoped, tag = 'output window, operand 0, single buffered']
    %10 = vsyncpa [#allocation4], 0
    %11 = vsyncpa [#allocation7], 0
    %12 = vsyncpa [#allocation5], 0
    // Predicated region
    $region2: #{tpu_custom_call.1} parent=1 // pred_check
      _
    $region3: #{tpu_custom_call.1} parent=1 // pred_check_branch
      %14 = sbr.rel (0) target = $region5
    $region4: #{tpu_custom_call.1} parent=1 // pred_region
      %s16 = ssub.s32 128, 128
      %17 = vsyncadd [#allocation4], %s16
      %s19 = sshll.u32 [#allocation3], 4
      %s20 = int_to_ptr.vmem [resolvable:$true] %s19
      %22 = dma.hbm_to_vmem [thread:$0]  %s0, 128, %s20, [#allocation4]
    $region5: #{tpu_custom_call.1} parent=1 // pred_fallthru
      _
    // Predicated region
    $region6: #{tpu_custom_call.1} parent=1 // pred_check
      _
    $region7: #{tpu_custom_call.1} parent=1 // pred_check_branch
      %24 = sbr.rel (0) target = $region9
    $region8: #{tpu_custom_call.1} parent=1 // pred_region
      %s26 = ssub.s32 2048, 2048
      %27 = vsyncadd [#allocation7], %s26
      %s28 = sshll.u32 [#allocation6], 4
      %s29 = int_to_ptr.vmem [resolvable:$true] %s28
      %34 = dma.hbm_to_vmem [thread:$0]  %s1, 2048, %s29, [#allocation7], 128, 128, 8
    $region9: #{tpu_custom_call.1} parent=1 // pred_fallthru
      _
    // Predicated region
    $region10: #{tpu_custom_call.1} parent=1 // pred_check
      _
    $region11: #{tpu_custom_call.1} parent=1 // pred_check_branch
      %36 = sbr.rel (0) target = $region13
    $region12: #{tpu_custom_call.1} parent=1 // pred_region
      _
    $region13: #{tpu_custom_call.1} parent=1 // pred_fallthru
      _
    // Predicated region
    $region14: #{tpu_custom_call.1} parent=1 // pred_check
      _
    $region15: #{tpu_custom_call.1} parent=1 // pred_check_branch
      %38 = sbr.rel (0) target = $region17
    $region16: #{tpu_custom_call.1} parent=1 // pred_region
      %s40 = ssub.s32 2048, 2048
      %41 = vsyncadd [#allocation7], %s40
      %s42 = sshll.u32 [#allocation8], 4
      %s43 = int_to_ptr.vmem [resolvable:$true] %s42
      %48 = dma.hbm_to_vmem [thread:$0]  %s3, 2048, %s43, [#allocation7], 128, 128, 8
    $region17: #{tpu_custom_call.1} parent=1 // pred_fallthru
      _
    // Predicated region
    $region18: #{tpu_custom_call.1} parent=1 // pred_check
      _
    $region19: #{tpu_custom_call.1} parent=1 // pred_check_branch
      %50 = sbr.rel (0) target = $region21
    $region20: #{tpu_custom_call.1} parent=1 // pred_region
      _
    $region21: #{tpu_custom_call.1} parent=1 // pred_fallthru
      _
    // Predicated region
    $region22: #{tpu_custom_call.1} parent=1 // pred_check
      _
    $region23: #{tpu_custom_call.1} parent=1 // pred_check_branch
      %52 = sbr.rel (0) target = $region25
    $region24: #{tpu_custom_call.1} parent=1 // pred_region
      %53 = dma.done [#allocation4], 128
    $region25: #{tpu_custom_call.1} parent=1 // pred_fallthru
      _
    // Predicated region
    $region26: #{tpu_custom_call.1} parent=1 // pred_check
      _
    $region27: #{tpu_custom_call.1} parent=1 // pred_check_branch
      %55 = sbr.rel (0) target = $region29
    $region28: #{tpu_custom_call.1} parent=1 // pred_region
      %56 = dma.done [#allocation7], 2048
    $region29: #{tpu_custom_call.1} parent=1 // pred_fallthru
      _
    // Predicated region
    $region30: #{tpu_custom_call.1} parent=1 // pred_check
      _
    $region31: #{tpu_custom_call.1} parent=1 // pred_check_branch
      %58 = sbr.rel (0) target = $region33
    $region32: #{tpu_custom_call.1} parent=1 // pred_region
      %59 = dma.done [#allocation7], 2048
    $region33: #{tpu_custom_call.1} parent=1 // pred_fallthru
      _
    %p60 = scmp.eq.s32.totalorder 0, 0
    // Predicated region
    $region34: #{tpu_custom_call.1} parent=1 // pred_check
      %p61 = pneg %p60
    $region35: #{tpu_custom_call.1} parent=1 // pred_check_branch
      %63 = sbr.rel (%p61) target = $region37
    $region36: #{tpu_custom_call.1} parent=1 // pred_region
      %64 = vst [vmem:[#allocation2] sm:$0xff] 0.0
    $region37: #{tpu_custom_call.1} parent=1 // pred_fallthru
      _
    %v65 = vld [vmem:[#allocation3] sm:$0xff]
    %v66 = vld [vmem:[#allocation6] sm:$0xff]
    %v67 = vld [vmem:[#allocation6 + $0x8] sm:$0xff]
    %v68 = vld [vmem:[#allocation6 + $0x10] sm:$0xff]
    %v69 = vld [vmem:[#allocation6 + $0x18] sm:$0xff]
    %v70 = vld [vmem:[#allocation6 + $0x20] sm:$0xff]
    %v71 = vld [vmem:[#allocation6 + $0x28] sm:$0xff]
    %v72 = vld [vmem:[#allocation6 + $0x30] sm:$0xff]
    %v73 = vld [vmem:[#allocation6 + $0x38] sm:$0xff]
    %v74 = vld [vmem:[#allocation6 + $0x40] sm:$0xff]
    %v75 = vld [vmem:[#allocation6 + $0x48] sm:$0xff]
    %v76 = vld [vmem:[#allocation6 + $0x50] sm:$0xff]
    %v77 = vld [vmem:[#allocation6 + $0x58] sm:$0xff]
    %v78 = vld [vmem:[#allocation6 + $0x60] sm:$0xff]
    %v79 = vld [vmem:[#allocation6 + $0x68] sm:$0xff]
    %v80 = vld [vmem:[#allocation6 + $0x70] sm:$0xff]
    %v81 = vld [vmem:[#allocation6 + $0x78] sm:$0xff]
    %v82 = vld [vmem:[%s2] sm:$0x1]
    %v84 = vlaneseq
    %v85 = vshrl.u32 %v84, 7
    %v86 = vsub.s32 0, %v85
    %v87 = vrot.slane %v82, %v86
    %89 = vmatprep.subr.mxu0 0.0
    %90 = vmatpush1.msra.mxu0 %v81
    %91 = vmatprep.subr.mxu0 0.0
    %92 = vmatpush1.msra.mxu0 %v80
    %93 = vmatprep.subr.mxu0 0.0
    %94 = vmatpush1.msra.mxu0 %v79
    %95 = vmatprep.subr.mxu0 0.0
    %96 = vmatpush1.msra.mxu0 %v78
    %97 = vmatprep.subr.mxu0 0.0
    %98 = vmatpush1.msra.mxu0 %v77
    %99 = vmatprep.subr.mxu0 0.0
    %100 = vmatpush1.msra.mxu0 %v76
    %101 = vmatprep.subr.mxu0 0.0
    %102 = vmatpush1.msra.mxu0 %v75
    %103 = vmatprep.subr.mxu0 0.0
    %104 = vmatpush1.msra.mxu0 %v74
    %105 = vmatprep.subr.mxu0 0.0
    %106 = vmatpush1.msra.mxu0 %v73
    %107 = vmatprep.subr.mxu0 0.0
    %108 = vmatpush1.msra.mxu0 %v72
    %109 = vmatprep.subr.mxu0 0.0
    %110 = vmatpush1.msra.mxu0 %v71
    %111 = vmatprep.subr.mxu0 0.0
    %112 = vmatpush1.msra.mxu0 %v70
    %113 = vmatprep.subr.mxu0 0.0
    %114 = vmatpush1.msra.mxu0 %v69
    %115 = vmatprep.subr.mxu0 0.0
    %116 = vmatpush1.msra.mxu0 %v68
    %117 = vmatprep.subr.mxu0 0.0
    %118 = vmatpush1.msra.mxu0 %v67
    %119 = vmatprep.subr.mxu0 0.0
    %120 = vmatpush1.msra.mxu0 %v66
    %121 = vmatprep.subr.mxu0 0.0
    %122 = vmatpush2.msra.mxu0 0.0
    %123 = vmatprep.subr.mxu0 0.0
    %124 = vmatpush2.msra.mxu0 0.0
    %125 = vmatprep.subr.mxu0 0.0
    %126 = vmatpush2.msra.mxu0 0.0
    %127 = vmatprep.subr.mxu0 0.0
    %128 = vmatpush2.msra.mxu0 0.0
    %129 = vmatprep.subr.mxu0 0.0
    %130 = vmatpush2.msra.mxu0 0.0
    %131 = vmatprep.subr.mxu0 0.0
    %132 = vmatpush2.msra.mxu0 0.0
    %133 = vmatprep.subr.mxu0 0.0
    %134 = vmatpush2.msra.mxu0 0.0
    %135 = vmatprep.subr.mxu0 0.0
    %136 = vmatpush2.msra.mxu0 0.0
    %137 = vmatprep.subr.mxu0 0.0
    %138 = vmatpush2.msra.mxu0 0.0
    %139 = vmatprep.subr.mxu0 0.0
    %140 = vmatpush2.msra.mxu0 0.0
    %141 = vmatprep.subr.mxu0 0.0
    %142 = vmatpush2.msra.mxu0 0.0
    %143 = vmatprep.subr.mxu0 0.0
    %144 = vmatpush2.msra.mxu0 0.0
    %145 = vmatprep.subr.mxu0 0.0
    %146 = vmatpush2.msra.mxu0 0.0
    %147 = vmatprep.subr.mxu0 0.0
    %148 = vmatpush2.msra.mxu0 0.0
    %149 = vmatprep.subr.mxu0 0.0
    %150 = vmatpush2.msra.mxu0 0.0
    %151 = vmatprep.subr.mxu0 0.0
    %152 = vmatpush2.msra.mxu0 0.0
    %153 = vmatprep.mubr.f32.mxu0 0.0
    %154 = vmatmul.mubr.f32.gmra.mxu0 %v65
    %v155 = vpop.f32.mrf.mxu0
    %v156 = vadd.f32 %v87, %v155
    %v157 = vpop.f32.mrf.mxu0
    %158 = vdwg.mxu0
    %v159 = vmax.f32 %v156, 0.0
    %v160 = vld [vmem:[#allocation2] sm:$0xff]
    %v161 = vld [vmem:[#allocation8] sm:$0xff]
    %v162 = vld [vmem:[#allocation8 + $0x8] sm:$0xff]
    %v163 = vld [vmem:[#allocation8 + $0x10] sm:$0xff]
    %v164 = vld [vmem:[#allocation8 + $0x18] sm:$0xff]
    %v165 = vld [vmem:[#allocation8 + $0x20] sm:$0xff]
    %v166 = vld [vmem:[#allocation8 + $0x28] sm:$0xff]
    %v167 = vld [vmem:[#allocation8 + $0x30] sm:$0xff]
    %v168 = vld [vmem:[#allocation8 + $0x38] sm:$0xff]
    %v169 = vld [vmem:[#allocation8 + $0x40] sm:$0xff]
    %v170 = vld [vmem:[#allocation8 + $0x48] sm:$0xff]
    %v171 = vld [vmem:[#allocation8 + $0x50] sm:$0xff]
    %v172 = vld [vmem:[#allocation8 + $0x58] sm:$0xff]
    %v173 = vld [vmem:[#allocation8 + $0x60] sm:$0xff]
    %v174 = vld [vmem:[#allocation8 + $0x68] sm:$0xff]
    %v175 = vld [vmem:[#allocation8 + $0x70] sm:$0xff]
    %v176 = vld [vmem:[#allocation8 + $0x78] sm:$0xff]
    %177 = vmatprep.subr.mxu0 0.0
    %178 = vmatpush1.msra.mxu0 %v176
    %179 = vmatprep.subr.mxu0 0.0
    %180 = vmatpush1.msra.mxu0 %v175
    %181 = vmatprep.subr.mxu0 0.0
    %182 = vmatpush1.msra.mxu0 %v174
    %183 = vmatprep.subr.mxu0 0.0
    %184 = vmatpush1.msra.mxu0 %v173
    %185 = vmatprep.subr.mxu0 0.0
    %186 = vmatpush1.msra.mxu0 %v172
    %187 = vmatprep.subr.mxu0 0.0
    %188 = vmatpush1.msra.mxu0 %v171
    %189 = vmatprep.subr.mxu0 0.0
    %190 = vmatpush1.msra.mxu0 %v170
    %191 = vmatprep.subr.mxu0 0.0
    %192 = vmatpush1.msra.mxu0 %v169
    %193 = vmatprep.subr.mxu0 0.0
    %194 = vmatpush1.msra.mxu0 %v168
    %195 = vmatprep.subr.mxu0 0.0
    %196 = vmatpush1.msra.mxu0 %v167
    %197 = vmatprep.subr.mxu0 0.0
    %198 = vmatpush1.msra.mxu0 %v166
    %199 = vmatprep.subr.mxu0 0.0
    %200 = vmatpush1.msra.mxu0 %v165
    %201 = vmatprep.subr.mxu0 0.0
    %202 = vmatpush1.msra.mxu0 %v164
    %203 = vmatprep.subr.mxu0 0.0
    %204 = vmatpush1.msra.mxu0 %v163
    %205 = vmatprep.subr.mxu0 0.0
    %206 = vmatpush1.msra.mxu0 %v162
    %207 = vmatprep.subr.mxu0 0.0
    %208 = vmatpush1.msra.mxu0 %v161
    %209 = vmatprep.subr.mxu0 0.0
    %210 = vmatpush2.msra.mxu0 0.0
    %211 = vmatprep.subr.mxu0 0.0
    %212 = vmatpush2.msra.mxu0 0.0
    %213 = vmatprep.subr.mxu0 0.0
    %214 = vmatpush2.msra.mxu0 0.0
    %215 = vmatprep.subr.mxu0 0.0
    %216 = vmatpush2.msra.mxu0 0.0
    %217 = vmatprep.subr.mxu0 0.0
    %218 = vmatpush2.msra.mxu0 0.0
    %219 = vmatprep.subr.mxu0 0.0
    %220 = vmatpush2.msra.mxu0 0.0
    %221 = vmatprep.subr.mxu0 0.0
    %222 = vmatpush2.msra.mxu0 0.0
    %223 = vmatprep.subr.mxu0 0.0
    %224 = vmatpush2.msra.mxu0 0.0
    %225 = vmatprep.subr.mxu0 0.0
    %226 = vmatpush2.msra.mxu0 0.0
    %227 = vmatprep.subr.mxu0 0.0
    %228 = vmatpush2.msra.mxu0 0.0
    %229 = vmatprep.subr.mxu0 0.0
    %230 = vmatpush2.msra.mxu0 0.0
    %231 = vmatprep.subr.mxu0 0.0
    %232 = vmatpush2.msra.mxu0 0.0
    %233 = vmatprep.subr.mxu0 0.0
    %234 = vmatpush2.msra.mxu0 0.0
    %235 = vmatprep.subr.mxu0 0.0
    %236 = vmatpush2.msra.mxu0 0.0
    %237 = vmatprep.subr.mxu0 0.0
    %238 = vmatpush2.msra.mxu0 0.0
    %239 = vmatprep.subr.mxu0 0.0
    %240 = vmatpush2.msra.mxu0 0.0
    %241 = vmatprep.mubr.f32.mxu0 0.0
    %242 = vmatmul.mubr.f32.gmra.mxu0 %v159
    %v243 = vpop.f32.mrf.mxu0
    %v244 = vadd.f32 0.0, %v243
    %v245 = vpop.f32.mrf.mxu0
    %246 = vdwg.mxu0
    %v247 = vadd.f32 %v160, %v244
    %248 = vst [vmem:[#allocation2] sm:$0xff] %v247
    // Predicated region
    $region38: #{tpu_custom_call.1} parent=1 // pred_check
      %p249 = pneg %p60
    $region39: #{tpu_custom_call.1} parent=1 // pred_check_branch
      %251 = sbr.rel (%p249) target = $region41
    $region40: #{tpu_custom_call.1} parent=1 // pred_region
      %v252 = vld [vmem:[#allocation2] sm:$0xff]
      %v253 = vld [vmem:[%s4] sm:$0x1]
      %v255 = vlaneseq
      %v256 = vshrl.u32 %v255, 7
      %v257 = vsub.s32 0, %v256
      %v258 = vrot.slane %v253, %v257
      %v260 = vadd.f32 %v252, %v258
      %261 = vst [vmem:[#allocation9] sm:$0xff] %v260
    $region41: #{tpu_custom_call.1} parent=1 // pred_fallthru
      _
    // Predicated region
    $region42: #{tpu_custom_call.1} parent=1 // pred_check
      _
    $region43: #{tpu_custom_call.1} parent=1 // pred_check_branch
      %263 = sbr.rel (0) target = $region45
    $region44: #{tpu_custom_call.1} parent=1 // pred_region
      %s265 = ssub.s32 128, 128
      %266 = vsyncadd [#allocation5], %s265
      %s268 = sshll.u32 [#allocation9], 4
      %s269 = int_to_ptr.vmem [resolvable:$true] %s268
      %271 = dma.vmem_to_hbm [thread:$0]  %s269, 128, %s5, [#allocation5]
    $region45: #{tpu_custom_call.1} parent=1 // pred_fallthru
      _
    // Predicated region
    $region46: #{tpu_custom_call.1} parent=1 // pred_check
      _
    $region47: #{tpu_custom_call.1} parent=1 // pred_check_branch
      %273 = sbr.rel (0) target = $region49
    $region48: #{tpu_custom_call.1} parent=1 // pred_region
      %274 = dma.done [#allocation5], 128
    $region49: #{tpu_custom_call.1} parent=1 // pred_fallthru
      _
    %275 = vsyncpa [#allocation4], 1
    %276 = vsyncpa [#allocation7], 1
    %277 = vsyncpa [#allocation5], 1

</llo_original>
